<compile_context>
chip_gen: v6e
topology: v6e:2x2x1
jax: 0.10.0
libtpu: 0.0.40
codegen_flags: <defaults>
</compile_context>

<pallas_src>
import functools

import jax
import jax.numpy as jnp
from jax.experimental import pallas as pl
from jax.experimental.pallas import tpu as pltpu


def conv_layer_kernel(w_ref, x_ref, wcat_ref, bcat_ref, o_ref,
                      *, tb, n, fout, compute_dtype):
    """One grid step = TB graphs.

    w_ref    : (TB, N, N)        adjacency (input dtype; cast to compute dtype here)
    x_ref    : (TB*N, Fin)       node features, batch-flattened (input dtype)
    wcat_ref : (Fin, 2*Fout)     folded [wa | wi] weights (compute dtype)
    bcat_ref : (1, 2*Fout)       folded [ba | bi] biases (f32)
    o_ref    : (TB, N, Fout)     output block (x.dtype), un-padded lane width
    """
    x = x_ref[...].astype(compute_dtype)                       # (TB*N, Fin)

    # Single merged weight-shared GEMM over all TB*N rows, f32 accumulation.
    ai = jnp.dot(x, wcat_ref[...],
                 preferred_element_type=jnp.float32) + bcat_ref[...]   # (TB*N, 2*Fout)

    # Split branches (static lane slices) and restore the per-graph leading dim.
    a = ai[:, :fout].reshape(tb, n, fout).astype(compute_dtype)   # propagation branch
    ident = ai[:, fout:].reshape(tb, n, fout)                     # identity branch (f32)

    # Batched per-graph propagation: (TB,N,N) @ (TB,N,Fout) on the MXU, f32 acc.
    w = w_ref[...].astype(compute_dtype)
    prop = jnp.einsum('tij,tjf->tif', w, a,
                      preferred_element_type=jnp.float32)          # (TB, N, Fout)

    # Fused bias-free epilogue: add identity branch, ReLU, single block store.
    o_ref[...] = jnp.maximum(prop + ident, 0.0).astype(o_ref.dtype)


def conv_layer_forward(W, x, params, *, compute_dtype=jnp.bfloat16,
                       num_batch_blocks=None, vmem_budget_bytes=12 << 20):
    """W: (B, N, N), x: (B, N, Fin) -> (B, N, Fout)."""
    B, N, Fin = x.shape
    Fout = params["out_features"]

    # Tiny folded parameters; cast here is negligible (Fin x 2*Fout elements).
    w_cat = params["w_cat"].astype(compute_dtype)   # (Fin, 2*Fout)
    b_cat = params["b_cat"]                         # (1, 2*Fout), f32

    cbytes = jnp.dtype(compute_dtype).itemsize
    if num_batch_blocks is None:
        # VMEM-budget-driven batch tile (keeps the same code portable to v7x's
        # 64 MiB VMEM).  2x on the I/O blocks accounts for double buffering.
        in_bytes = N * N * W.dtype.itemsize + N * Fin * x.dtype.itemsize
        out_bytes = N * Fout * x.dtype.itemsize
        work_bytes = (N * N + N * Fin + N * Fout) * cbytes + N * (3 * Fout) * 4
        per_b = 2 * (in_bytes + out_bytes) + work_bytes
        tb_max = max(1, vmem_budget_bytes // per_b)
        # NOTE: on v7x (2 TensorCores) pass num_batch_blocks explicitly (>= 4 per
        # core) so the "parallel" batch axis shards and pipelines across cores.
        num_batch_blocks = pl.cdiv(B, min(B, tb_max))

    TB = pl.cdiv(B, num_batch_blocks)
    Bpad = TB * num_batch_blocks
    if Bpad != B:   # divisor-free batch handling: pad with empty graphs
        W = jnp.pad(W, ((0, Bpad - B), (0, 0), (0, 0)))
        x = jnp.pad(x, ((0, Bpad - B), (0, 0), (0, 0)))

    x2d = x.reshape(Bpad * N, Fin)   # free metadata reshape (row-major contiguous)

    kernel = functools.partial(conv_layer_kernel, tb=TB, n=N, fout=Fout,
                               compute_dtype=compute_dtype)

    out = pl.pallas_call(
        kernel,
        out_shape=jax.ShapeDtypeStruct((Bpad, N, Fout), x.dtype),
        grid_spec=pltpu.PrefetchScalarGridSpec(
            num_scalar_prefetch=0,
            grid=(num_batch_blocks,),
            in_specs=[
                pl.BlockSpec((TB, N, N), lambda b: (b, 0, 0)),      # W (cast in-kernel)
                pl.BlockSpec((TB * N, Fin), lambda b: (b, 0)),      # x (flattened)
                pl.BlockSpec(w_cat.shape, lambda b: (0, 0)),        # merged weights
                pl.BlockSpec(b_cat.shape, lambda b: (0, 0)),        # merged biases
            ],
            out_specs=pl.BlockSpec((TB, N, Fout), lambda b: (b, 0, 0)),
        ),
        compiler_params=pltpu.CompilerParams(
            dimension_semantics=("parallel",),
            vmem_limit_bytes=32 * 1024 * 1024),
    )(W, x2d, w_cat, b_cat)

    return out if Bpad == B else out[:B]


def init_params(key, in_nfeat, out_nfeat):
    """Synthetic parameters matching the PyTorch module's shapes/inits, plus the
    algebraic pre-fold used by the kernel.  Returns (folded, raw)."""
    k = jax.random.split(key, 5)
    # feature_processor = nn.Linear(in, out): weight (out,in), bias (out,)
    Wp = jax.random.normal(k[0], (out_nfeat, in_nfeat), jnp.float32) * 0.1
    bp = jax.random.normal(k[1], (out_nfeat,), jnp.float32) * 0.01
    # dim_match = nn.Linear(in, out) with orthogonal weight
    Wd = jax.nn.initializers.orthogonal()(k[2], (out_nfeat, in_nfeat), jnp.float32)
    bd = jax.random.normal(k[3], (out_nfeat,), jnp.float32) * 0.01
    # feature_fusion = nn.Linear(2*out, out): xavier weight, zero bias
    Wf = jax.nn.initializers.xavier_uniform()(k[4], (out_nfeat, 2 * out_nfeat),
                                              jnp.float32)
    bf = jnp.zeros((out_nfeat,), jnp.float32)

    # x @ W layout
    wp, wd = Wp.T, Wd.T                                   # (Fin, Fout)
    wf1, wf2 = Wf[:, :out_nfeat].T, Wf[:, out_nfeat:].T   # (Fout, Fout)

    # Algebraic fold of feature_fusion(cat([x_prop, id_proj])) into the branches:
    #   fused = W @ (x @ (wp@wf1) + bp@wf1) + x @ (wd@wf2) + (bd@wf2 + bf)
    wa = wp @ wf1
    ba = bp @ wf1
    wi = wd @ wf2
    bi = bd @ wf2 + bf

    # Merge the two branch GEMMs into a single (Fin, 2*Fout) matrix / bias so the
    # kernel does ONE shared MXU pass over x and splits the result.
    folded = dict(
        w_cat=jnp.concatenate([wa, wi], axis=1),             # (Fin, 2*Fout)
        b_cat=jnp.concatenate([ba, bi], axis=0)[None, :],     # (1, 2*Fout)
        out_features=out_nfeat,
    )
    raw = dict(wp=wp, bp=bp[None, :], wd=wd, bd=bd[None, :],
               wf1=wf1, wf2=wf2, bf=bf[None, :])
    return folded, raw


def reference_forward(W, x, raw):
    """Pure-JAX f32 reference mirroring the PyTorch forward exactly (unfused)."""
    x_proc = x @ raw["wp"] + raw["bp"]
    x_prop = jnp.einsum("bij,bjf->bif", W, x_proc)
    id_proj = x @ raw["wd"] + raw["bd"]
    fused = x_prop @ raw["wf1"] + id_proj @ raw["wf2"] + raw["bf"]
    return jnp.maximum(fused, 0.0)   # dropout_rate=0 -> Identity


if __name__ == "__main__":
    # Shapes consistent with the module: max_size=8 -> N = 64 nodes.
    B, max_size, in_nfeat, out_nfeat = 2, 8, 16, 32
    N = max_size * max_size

    key = jax.random.PRNGKey(0)
    kW, kx, kp = jax.random.split(key, 3)
    W = jax.random.uniform(kW, (B, N, N), jnp.float32)         # adjacency
    x = jax.random.normal(kx, (B, N, in_nfeat), jnp.float32)   # node features
    params, raw = init_params(kp, in_nfeat, out_nfeat)

    ref = reference_forward(W, x, raw)

    # 1) Strict structural check in f32 (verifies the fold + merged-GEMM plumbing).
    out_f32 = jax.block_until_ready(
        conv_layer_forward(W, x, params, compute_dtype=jnp.float32))
    assert out_f32.shape == (B, N, out_nfeat)
    assert jnp.allclose(out_f32, ref, atol=1e-3, rtol=1e-3)

    # 2) bf16-operand / f32-accumulate path (MXU-native on v6e/v7x).
    out_bf16 = jax.block_until_ready(
        conv_layer_forward(W, x, params, compute_dtype=jnp.bfloat16))
    assert out_bf16.shape == (B, N, out_nfeat)
    assert jnp.allclose(out_bf16, ref, atol=1e-1, rtol=5e-2)

    # 3) Odd batch + multi-step grid: exercises the batch-padding path (B=3, 2 blocks).
    B3 = 3
    W3 = jax.random.uniform(jax.random.PRNGKey(1), (B3, N, N), jnp.float32)
    x3 = jax.random.normal(jax.random.PRNGKey(2), (B3, N, in_nfeat), jnp.float32)
    ref3 = reference_forward(W3, x3, raw)
    out3 = jax.block_until_ready(
        conv_layer_forward(W3, x3, params, compute_dtype=jnp.float32,
                           num_batch_blocks=2))
    assert out3.shape == (B3, N, out_nfeat)
    assert jnp.allclose(out3, ref3, atol=1e-3, rtol=1e-3)

    print("KERNEL_OK")
</pallas_src>

<mosaic_0001>
module attributes {stable_mosaic.version = 11 : i64} {
  func.func @conv_layer_kernel(%arg0: i32, %arg1: memref<2x64x64xf32, #tpu.memory_space<vmem>>, %arg2: memref<128x16xf32, #tpu.memory_space<vmem>>, %arg3: memref<16x64xf32, #tpu.memory_space<vmem>>, %arg4: memref<1x64xf32, #tpu.memory_space<vmem>>, %arg5: memref<2x64x32xf32, #tpu.memory_space<vmem>>) attributes {dimension_semantics = [#tpu.dimension_semantics<parallel>], iteration_bounds = array<i64: 1>, scalar_prefetch = 0 : i64, scratch_operands = 0 : i64, tpu.core_type = #tpu.core_type<tc>, window_params = [{transform_indices = @transform_0, window_bounds = array<i64: 2, 64, 64>}, {transform_indices = @transform_1, window_bounds = array<i64: 128, 16>}, {pipeline_mode = #tpu.pipeline_mode<synchronous>, transform_indices = @transform_2, window_bounds = array<i64: 16, 64>}, {pipeline_mode = #tpu.pipeline_mode<synchronous>, transform_indices = @transform_3, window_bounds = array<i64: 1, 64>}, {transform_indices = @transform_4, window_bounds = array<i64: 2, 64, 32>}]} {
    %c0 = arith.constant 0 : index
    %c0_0 = arith.constant 0 : index
    %0 = vector.load %arg2[%c0, %c0_0] : memref<128x16xf32, #tpu.memory_space<vmem>>, vector<128x16xf32>
    %c0_1 = arith.constant 0 : index
    %c0_2 = arith.constant 0 : index
    %1 = vector.load %arg3[%c0_1, %c0_2] : memref<16x64xf32, #tpu.memory_space<vmem>>, vector<16x64xf32>
    %cst = arith.constant dense<0.000000e+00> : vector<128x64xf32>
    %2 = tpu.matmul %0, %1, %cst {dimension_numbers = #tpu.dot_dimension_numbers<[1], [0], [0], [1], [0, 0, 1, 1], [], []>} : vector<128x16xf32>, vector<16x64xf32>, vector<128x64xf32> -> vector<128x64xf32>
    %c0_3 = arith.constant 0 : index
    %c0_4 = arith.constant 0 : index
    %3 = vector.load %arg4[%c0_3, %c0_4] : memref<1x64xf32, #tpu.memory_space<vmem>>, vector<1x64xf32>
    %4 = vector.broadcast %3 : vector<1x64xf32> to vector<128x64xf32>
    %5 = arith.addf %2, %4 : vector<128x64xf32>
    %6 = vector.extract_strided_slice %5 {offsets = [0, 0], sizes = [128, 32], strides = [1, 1]} : vector<128x64xf32> to vector<128x32xf32>
    %7 = vector.shape_cast %6 : vector<128x32xf32> to vector<2x64x32xf32>
    %8 = vector.extract_strided_slice %5 {offsets = [0, 32], sizes = [128, 32], strides = [1, 1]} : vector<128x64xf32> to vector<128x32xf32>
    %9 = vector.shape_cast %8 : vector<128x32xf32> to vector<2x64x32xf32>
    %c0_5 = arith.constant 0 : index
    %c0_6 = arith.constant 0 : index
    %c0_7 = arith.constant 0 : index
    %10 = vector.load %arg1[%c0_5, %c0_6, %c0_7] : memref<2x64x64xf32, #tpu.memory_space<vmem>>, vector<2x64x64xf32>
    "tpu.trace_start"() <{level = 10 : i32, message = "tij,tjf->tif"}> : () -> ()
    %cst_8 = arith.constant dense<0.000000e+00> : vector<2x64x32xf32>
    %11 = tpu.matmul %10, %7, %cst_8 {dimension_numbers = #tpu.dot_dimension_numbers<[2], [1], [1], [2], [0, 0, 0, 1, 1, 2], [0], [0]>} : vector<2x64x64xf32>, vector<2x64x32xf32>, vector<2x64x32xf32> -> vector<2x64x32xf32>
    "tpu.trace_stop"() : () -> ()
    %12 = arith.addf %11, %9 : vector<2x64x32xf32>
    %cst_9 = arith.constant 0.000000e+00 : f32
    %13 = vector.broadcast %cst_9 : f32 to vector<2x64x32xf32>
    %14 = arith.maximumf %12, %13 : vector<2x64x32xf32>
    %c0_10 = arith.constant 0 : index
    %c0_11 = arith.constant 0 : index
    %c0_12 = arith.constant 0 : index
    %15 = vector.load %arg5[%c0_10, %c0_11, %c0_12] : memref<2x64x32xf32, #tpu.memory_space<vmem>>, vector<2x64x32xf32>
    tpu.vector_store %arg5[%c0_10, %c0_11, %c0_12], %14 {strides = array<i32>} : memref<2x64x32xf32, #tpu.memory_space<vmem>>, vector<2x64x32xf32>,
    return
  }
  func.func @transform_0(%arg0: i32) -> (i32, i32, i32) {
    %c0_i32 = arith.constant 0 : i32
    %c0_i32_0 = arith.constant 0 : i32
    %c0_i32_1 = arith.constant 0 : i32
    return %arg0, %c0_i32, %c0_i32_0 : i32, i32, i32
  }
  func.func @transform_1(%arg0: i32) -> (i32, i32) {
    %c0_i32 = arith.constant 0 : i32
    %c0_i32_0 = arith.constant 0 : i32
    return %arg0, %c0_i32 : i32, i32
  }
  func.func @transform_2(%arg0: i32) -> (i32, i32) {
    %c0_i32 = arith.constant 0 : i32
    %c0_i32_0 = arith.constant 0 : i32
    %c0_i32_1 = arith.constant 0 : i32
    return %c0_i32, %c0_i32_0 : i32, i32
  }
  func.func @transform_3(%arg0: i32) -> (i32, i32) {
    %c0_i32 = arith.constant 0 : i32
    %c0_i32_0 = arith.constant 0 : i32
    %c0_i32_1 = arith.constant 0 : i32
    return %c0_i32, %c0_i32_0 : i32, i32
  }
  func.func @transform_4(%arg0: i32) -> (i32, i32, i32) {
    %c0_i32 = arith.constant 0 : i32
    %c0_i32_0 = arith.constant 0 : i32
    %c0_i32_1 = arith.constant 0 : i32
    return %arg0, %c0_i32, %c0_i32_0 : i32, i32, i32
  }
}

</mosaic_0001>

<llo_original>
// kernel: tpu_custom_call.1
$region0: #{tpu_custom_call.1}
  #allocation0 [shape = 'u32[]', space=smem, size = 0x4, offset = 0x4, fixed_abs, tag = 'smem constant byte address 0x4 - core index']
  #allocation1 [shape = 'u32[144,128]{1,0:T(1,128)}', space=vmem, size = 0x12000, scoped, tag = 'internal scratch']
  %s0 = inlined_call_operand.vmem [shape: f32[2,64,64], index: 0, kind: input, shape index: {}]
  %s1 = inlined_call_operand.vmem [shape: f32[128,16], index: 1, kind: input, shape index: {}]
  %s2 = inlined_call_operand.vmem [shape: f32[16,64], index: 2, kind: input, shape index: {}]
  %s3 = inlined_call_operand.vmem [shape: f32[1,64], index: 3, kind: input, shape index: {}]
  %s4 = inlined_call_operand.vmem [shape: f32[2,64,32], index: 4, kind: output, shape index: {}]
  %s5 = sld [smem:[#allocation0]]
  $region26: #{tpu_custom_call.1} parent=0
    _
  %s7 = ssub.s32 1, %s5
  %s8 = scalar_select 0, %s7, %s5
  // Predicated region
  $region2: #{tpu_custom_call.1} parent=0 // pred_check
    _
  $region3: #{tpu_custom_call.1} parent=0 // pred_check_branch
    %10 = sbr.rel (0) target = $region5
  $region4: #{tpu_custom_call.1} parent=0 // pred_region
    _
  $region5: #{tpu_custom_call.1} parent=0 // pred_fallthru
    _
  // Predicated region
  $region6: #{tpu_custom_call.1} parent=0 // pred_check
    _
  $region7: #{tpu_custom_call.1} parent=0 // pred_check_branch
    %12 = sbr.rel (0) target = $region9
  $region8: #{tpu_custom_call.1} parent=0 // pred_region
    _
  $region9: #{tpu_custom_call.1} parent=0 // pred_fallthru
    _
  // Predicated region
  $region10: #{tpu_custom_call.1} parent=0 // pred_check
    _
  $region11: #{tpu_custom_call.1} parent=0 // pred_check_branch
    %14 = sbr.rel (0) target = $region13
  $region12: #{tpu_custom_call.1} parent=0 // pred_region
    _
  $region13: #{tpu_custom_call.1} parent=0 // pred_fallthru
    _
  // Predicated region
  $region14: #{tpu_custom_call.1} parent=0 // pred_check
    _
  $region15: #{tpu_custom_call.1} parent=0 // pred_check_branch
    %16 = sbr.rel (0) target = $region17
  $region16: #{tpu_custom_call.1} parent=0 // pred_region
    _
  $region17: #{tpu_custom_call.1} parent=0 // pred_fallthru
    _
  %v17 = vld [vmem:[%s1] sm:$0xff]
  %v18 = vld [vmem:[%s1 + $0x8] sm:$0xff]
  %v19 = vld [vmem:[%s1 + $0x10] sm:$0xff]
  %v20 = vld [vmem:[%s1 + $0x18] sm:$0xff]
  %v21 = vld [vmem:[%s1 + $0x20] sm:$0xff]
  %v22 = vld [vmem:[%s1 + $0x28] sm:$0xff]
  %v23 = vld [vmem:[%s1 + $0x30] sm:$0xff]
  %v24 = vld [vmem:[%s1 + $0x38] sm:$0xff]
  %v25 = vld [vmem:[%s1 + $0x40] sm:$0xff]
  %v26 = vld [vmem:[%s1 + $0x48] sm:$0xff]
  %v27 = vld [vmem:[%s1 + $0x50] sm:$0xff]
  %v28 = vld [vmem:[%s1 + $0x58] sm:$0xff]
  %v29 = vld [vmem:[%s1 + $0x60] sm:$0xff]
  %v30 = vld [vmem:[%s1 + $0x68] sm:$0xff]
  %v31 = vld [vmem:[%s1 + $0x70] sm:$0xff]
  %v32 = vld [vmem:[%s1 + $0x78] sm:$0xff]
  %v33 = vld [vmem:[%s2] sm:$0xff]
  %v34 = vld [vmem:[%s2 + $0x8] sm:$0xff]
  %v35 = vld [vmem:[%s3] sm:$0x1]
  %v37 = vlaneseq
  %v38 = vshrl.u32 %v37, 7
  %v39 = vsub.s32 0, %v38
  %v40 = vrot.slane %v35, %v39
  %vm42 = vcmask 130048
  %v44 = vsel %vm42, %v17, 0
  %v47 = vsel %vm42, %v18, 0
  %v50 = vsel %vm42, %v19, 0
  %v53 = vsel %vm42, %v20, 0
  %v56 = vsel %vm42, %v21, 0
  %v59 = vsel %vm42, %v22, 0
  %v62 = vsel %vm42, %v23, 0
  %v65 = vsel %vm42, %v24, 0
  %v68 = vsel %vm42, %v25, 0
  %v71 = vsel %vm42, %v26, 0
  %v74 = vsel %vm42, %v27, 0
  %v77 = vsel %vm42, %v28, 0
  %v80 = vsel %vm42, %v29, 0
  %v83 = vsel %vm42, %v30, 0
  %v86 = vsel %vm42, %v31, 0
  %v89 = vsel %vm42, %v32, 0
  %91 = vmatprep.subr.mxu0 0.0
  %92 = vmatpush1.msra.mxu0 0.0
  %93 = vmatprep.subr.mxu0 0.0
  %94 = vmatpush1.msra.mxu0 0.0
  %95 = vmatprep.subr.mxu0 0.0
  %96 = vmatpush1.msra.mxu0 0.0
  %97 = vmatprep.subr.mxu0 0.0
  %98 = vmatpush1.msra.mxu0 0.0
  %99 = vmatprep.subr.mxu0 0.0
  %100 = vmatpush1.msra.mxu0 0.0
  %101 = vmatprep.subr.mxu0 0.0
  %102 = vmatpush1.msra.mxu0 0.0
  %103 = vmatprep.subr.mxu0 0.0
  %104 = vmatpush1.msra.mxu0 0.0
  %105 = vmatprep.subr.mxu0 0.0
  %106 = vmatpush1.msra.mxu0 0.0
  %107 = vmatprep.subr.mxu0 0.0
  %108 = vmatpush1.msra.mxu0 0.0
  %109 = vmatprep.subr.mxu0 0.0
  %110 = vmatpush1.msra.mxu0 0.0
  %111 = vmatprep.subr.mxu0 0.0
  %112 = vmatpush1.msra.mxu0 0.0
  %113 = vmatprep.subr.mxu0 0.0
  %114 = vmatpush1.msra.mxu0 0.0
  %115 = vmatprep.subr.mxu0 0.0
  %116 = vmatpush1.msra.mxu0 0.0
  %117 = vmatprep.subr.mxu0 0.0
  %118 = vmatpush1.msra.mxu0 0.0
  %119 = vmatprep.subr.mxu0 0.0
  %120 = vmatpush1.msra.mxu0 %v34
  %121 = vmatprep.subr.mxu0 0.0
  %122 = vmatpush1.msra.mxu0 %v33
  %123 = vmatprep.subr.mxu0 0.0
  %124 = vmatpush2.msra.mxu0 0.0
  %125 = vmatprep.subr.mxu0 0.0
  %126 = vmatpush2.msra.mxu0 0.0
  %127 = vmatprep.subr.mxu0 0.0
  %128 = vmatpush2.msra.mxu0 0.0
  %129 = vmatprep.subr.mxu0 0.0
  %130 = vmatpush2.msra.mxu0 0.0
  %131 = vmatprep.subr.mxu0 0.0
  %132 = vmatpush2.msra.mxu0 0.0
  %133 = vmatprep.subr.mxu0 0.0
  %134 = vmatpush2.msra.mxu0 0.0
  %135 = vmatprep.subr.mxu0 0.0
  %136 = vmatpush2.msra.mxu0 0.0
  %137 = vmatprep.subr.mxu0 0.0
  %138 = vmatpush2.msra.mxu0 0.0
  %139 = vmatprep.subr.mxu0 0.0
  %140 = vmatpush2.msra.mxu0 0.0
  %141 = vmatprep.subr.mxu0 0.0
  %142 = vmatpush2.msra.mxu0 0.0
  %143 = vmatprep.subr.mxu0 0.0
  %144 = vmatpush2.msra.mxu0 0.0
  %145 = vmatprep.subr.mxu0 0.0
  %146 = vmatpush2.msra.mxu0 0.0
  %147 = vmatprep.subr.mxu0 0.0
  %148 = vmatpush2.msra.mxu0 0.0
  %149 = vmatprep.subr.mxu0 0.0
  %150 = vmatpush2.msra.mxu0 0.0
  %151 = vmatprep.subr.mxu0 0.0
  %152 = vmatpush2.msra.mxu0 0.0
  %153 = vmatprep.subr.mxu0 0.0
  %154 = vmatpush2.msra.mxu0 0.0
  %155 = vmatprep.mubr.f32.mxu0 0.0
  %156 = vmatmul.mubr.f32.gmra.mxu0 %v44
  %v157 = vpop.f32.mrf.mxu0
  %v158 = vadd.f32 %v40, %v157
  %v159 = vpop.f32.mrf.mxu0
  %160 = vmatprep.mubr.f32.mxu0 0.0
  %161 = vmatmul.mubr.f32.gmra.mxu0 %v47
  %v162 = vpop.f32.mrf.mxu0
  %v163 = vadd.f32 %v40, %v162
  %v164 = vpop.f32.mrf.mxu0
  %165 = vmatprep.mubr.f32.mxu0 0.0
  %166 = vmatmul.mubr.f32.gmra.mxu0 %v50
  %v167 = vpop.f32.mrf.mxu0
  %v168 = vadd.f32 %v40, %v167
  %v169 = vpop.f32.mrf.mxu0
  %170 = vmatprep.mubr.f32.mxu0 0.0
  %171 = vmatmul.mubr.f32.gmra.mxu0 %v53
  %v172 = vpop.f32.mrf.mxu0
  %v173 = vadd.f32 %v40, %v172
  %v174 = vpop.f32.mrf.mxu0
  %175 = vmatprep.mubr.f32.mxu0 0.0
  %176 = vmatmul.mubr.f32.gmra.mxu0 %v56
  %v177 = vpop.f32.mrf.mxu0
  %v178 = vadd.f32 %v40, %v177
  %v179 = vpop.f32.mrf.mxu0
  %180 = vmatprep.mubr.f32.mxu0 0.0
  %181 = vmatmul.mubr.f32.gmra.mxu0 %v59
  %v182 = vpop.f32.mrf.mxu0
  %v183 = vadd.f32 %v40, %v182
  %v184 = vpop.f32.mrf.mxu0
  %185 = vmatprep.mubr.f32.mxu0 0.0
  %186 = vmatmul.mubr.f32.gmra.mxu0 %v62
  %v187 = vpop.f32.mrf.mxu0
  %v188 = vadd.f32 %v40, %v187
  %v189 = vpop.f32.mrf.mxu0
  %190 = vmatprep.mubr.f32.mxu0 0.0
  %191 = vmatmul.mubr.f32.gmra.mxu0 %v65
  %v192 = vpop.f32.mrf.mxu0
  %v193 = vadd.f32 %v40, %v192
  %v194 = vpop.f32.mrf.mxu0
  %195 = vmatprep.mubr.f32.mxu0 0.0
  %196 = vmatmul.mubr.f32.gmra.mxu0 %v68
  %v197 = vpop.f32.mrf.mxu0
  %v198 = vadd.f32 %v40, %v197
  %v199 = vpop.f32.mrf.mxu0
  %200 = vmatprep.mubr.f32.mxu0 0.0
  %201 = vmatmul.mubr.f32.gmra.mxu0 %v71
  %v202 = vpop.f32.mrf.mxu0
  %v203 = vadd.f32 %v40, %v202
  %v204 = vpop.f32.mrf.mxu0
  %205 = vmatprep.mubr.f32.mxu0 0.0
  %206 = vmatmul.mubr.f32.gmra.mxu0 %v74
  %v207 = vpop.f32.mrf.mxu0
  %v208 = vadd.f32 %v40, %v207
  %v209 = vpop.f32.mrf.mxu0
  %210 = vmatprep.mubr.f32.mxu0 0.0
  %211 = vmatmul.mubr.f32.gmra.mxu0 %v77
  %v212 = vpop.f32.mrf.mxu0
  %v213 = vadd.f32 %v40, %v212
  %v214 = vpop.f32.mrf.mxu0
  %215 = vmatprep.mubr.f32.mxu0 0.0
  %216 = vmatmul.mubr.f32.gmra.mxu0 %v80
  %v217 = vpop.f32.mrf.mxu0
  %v218 = vadd.f32 %v40, %v217
  %v219 = vpop.f32.mrf.mxu0
  %220 = vmatprep.mubr.f32.mxu0 0.0
  %221 = vmatmul.mubr.f32.gmra.mxu0 %v83
  %v222 = vpop.f32.mrf.mxu0
  %v223 = vadd.f32 %v40, %v222
  %v224 = vpop.f32.mrf.mxu0
  %225 = vmatprep.mubr.f32.mxu0 0.0
  %226 = vmatmul.mubr.f32.gmra.mxu0 %v86
  %v227 = vpop.f32.mrf.mxu0
  %v228 = vadd.f32 %v40, %v227
  %v229 = vpop.f32.mrf.mxu0
  %230 = vmatprep.mubr.f32.mxu0 0.0
  %231 = vmatmul.mubr.f32.gmra.mxu0 %v89
  %v232 = vpop.f32.mrf.mxu0
  %v233 = vadd.f32 %v40, %v232
  %v234 = vpop.f32.mrf.mxu0
  %235 = vdwg.mxu0
  %v236 = vld [vmem:[%s0] sm:$0xff]
  %v237 = vld [vmem:[%s0 + $0x8] sm:$0xff]
  %v238 = vld [vmem:[%s0 + $0x10] sm:$0xff]
  %v239 = vld [vmem:[%s0 + $0x18] sm:$0xff]
  %v240 = vld [vmem:[%s0 + $0x20] sm:$0xff]
  %v241 = vld [vmem:[%s0 + $0x28] sm:$0xff]
  %v242 = vld [vmem:[%s0 + $0x30] sm:$0xff]
  %v243 = vld [vmem:[%s0 + $0x38] sm:$0xff]
  %v244 = vld [vmem:[%s0 + $0x40] sm:$0xff]
  %v245 = vld [vmem:[%s0 + $0x48] sm:$0xff]
  %v246 = vld [vmem:[%s0 + $0x50] sm:$0xff]
  %v247 = vld [vmem:[%s0 + $0x58] sm:$0xff]
  %v248 = vld [vmem:[%s0 + $0x60] sm:$0xff]
  %v249 = vld [vmem:[%s0 + $0x68] sm:$0xff]
  %v250 = vld [vmem:[%s0 + $0x70] sm:$0xff]
  %v251 = vld [vmem:[%s0 + $0x78] sm:$0xff]
  %260 = vrot.lane.b32.xlu0 %v158, 96
  %v261 = vpop.permute.xlu0 %260
  %262 = vrot.lane.b32.xlu0 %v163, 96
  %v263 = vpop.permute.xlu0 %262
  %264 = vrot.lane.b32.xlu0 %v168, 96
  %v265 = vpop.permute.xlu0 %264
  %266 = vrot.lane.b32.xlu0 %v173, 96
  %v267 = vpop.permute.xlu0 %266
  %268 = vrot.lane.b32.xlu0 %v178, 96
  %v269 = vpop.permute.xlu0 %268
  %270 = vrot.lane.b32.xlu0 %v183, 96
  %v271 = vpop.permute.xlu0 %270
  %272 = vrot.lane.b32.xlu0 %v188, 96
  %v273 = vpop.permute.xlu0 %272
  %274 = vrot.lane.b32.xlu0 %v193, 96
  %v275 = vpop.permute.xlu0 %274
  %vm284 = vcmask 523264
  %v286 = vsel %vm284, %v236, 0
  %v289 = vsel %vm284, %v237, 0
  %v292 = vsel %vm284, %v238, 0
  %v295 = vsel %vm284, %v239, 0
  %v298 = vsel %vm284, %v240, 0
  %v301 = vsel %vm284, %v241, 0
  %v304 = vsel %vm284, %v242, 0
  %v307 = vsel %vm284, %v243, 0
  %309 = vmatprep.subr.mxu0 0.0
  %310 = vmatpush1.msra.mxu0 0.0
  %311 = vmatprep.subr.mxu0 0.0
  %312 = vmatpush1.msra.mxu0 0.0
  %313 = vmatprep.subr.mxu0 0.0
  %314 = vmatpush1.msra.mxu0 0.0
  %315 = vmatprep.subr.mxu0 0.0
  %316 = vmatpush1.msra.mxu0 0.0
  %317 = vmatprep.subr.mxu0 0.0
  %318 = vmatpush1.msra.mxu0 0.0
  %319 = vmatprep.subr.mxu0 0.0
  %320 = vmatpush1.msra.mxu0 0.0
  %321 = vmatprep.subr.mxu0 0.0
  %322 = vmatpush1.msra.mxu0 0.0
  %323 = vmatprep.subr.mxu0 0.0
  %324 = vmatpush1.msra.mxu0 0.0
  %325 = vmatprep.subr.mxu0 0.0
  %326 = vmatpush1.msra.mxu0 %v193
  %327 = vmatprep.subr.mxu0 0.0
  %328 = vmatpush1.msra.mxu0 %v188
  %329 = vmatprep.subr.mxu0 0.0
  %330 = vmatpush1.msra.mxu0 %v183
  %331 = vmatprep.subr.mxu0 0.0
  %332 = vmatpush1.msra.mxu0 %v178
  %333 = vmatprep.subr.mxu0 0.0
  %334 = vmatpush1.msra.mxu0 %v173
  %335 = vmatprep.subr.mxu0 0.0
  %336 = vmatpush1.msra.mxu0 %v168
  %337 = vmatprep.subr.mxu0 0.0
  %338 = vmatpush1.msra.mxu0 %v163
  %339 = vmatprep.subr.mxu0 0.0
  %340 = vmatpush1.msra.mxu0 %v158
  %341 = vmatprep.subr.mxu0 0.0
  %342 = vmatpush2.msra.mxu0 0.0
  %343 = vmatprep.subr.mxu0 0.0
  %344 = vmatpush2.msra.mxu0 0.0
  %345 = vmatprep.subr.mxu0 0.0
  %346 = vmatpush2.msra.mxu0 0.0
  %347 = vmatprep.subr.mxu0 0.0
  %348 = vmatpush2.msra.mxu0 0.0
  %349 = vmatprep.subr.mxu0 0.0
  %350 = vmatpush2.msra.mxu0 0.0
  %351 = vmatprep.subr.mxu0 0.0
  %352 = vmatpush2.msra.mxu0 0.0
  %353 = vmatprep.subr.mxu0 0.0
  %354 = vmatpush2.msra.mxu0 0.0
  %355 = vmatprep.subr.mxu0 0.0
  %356 = vmatpush2.msra.mxu0 0.0
  %357 = vmatprep.subr.mxu0 0.0
  %358 = vmatpush2.msra.mxu0 0.0
  %359 = vmatprep.subr.mxu0 0.0
  %360 = vmatpush2.msra.mxu0 0.0
  %361 = vmatprep.subr.mxu0 0.0
  %362 = vmatpush2.msra.mxu0 0.0
  %363 = vmatprep.subr.mxu0 0.0
  %364 = vmatpush2.msra.mxu0 0.0
  %365 = vmatprep.subr.mxu0 0.0
  %366 = vmatpush2.msra.mxu0 0.0
  %367 = vmatprep.subr.mxu0 0.0
  %368 = vmatpush2.msra.mxu0 0.0
  %369 = vmatprep.subr.mxu0 0.0
  %370 = vmatpush2.msra.mxu0 0.0
  %371 = vmatprep.subr.mxu0 0.0
  %372 = vmatpush2.msra.mxu0 0.0
  %373 = vmatprep.mubr.f32.mxu0 0.0
  %374 = vmatmul.mubr.f32.gmra.mxu0 %v286
  %v375 = vpop.f32.mrf.mxu0
  %v376 = vadd.f32 %v261, %v375
  %v377 = vpop.f32.mrf.mxu0
  %378 = vmatprep.mubr.f32.mxu0 0.0
  %379 = vmatmul.mubr.f32.gmra.mxu0 %v289
  %v380 = vpop.f32.mrf.mxu0
  %v381 = vadd.f32 %v263, %v380
  %v382 = vpop.f32.mrf.mxu0
  %383 = vmatprep.mubr.f32.mxu0 0.0
  %384 = vmatmul.mubr.f32.gmra.mxu0 %v292
  %v385 = vpop.f32.mrf.mxu0
  %v386 = vadd.f32 %v265, %v385
  %v387 = vpop.f32.mrf.mxu0
  %388 = vmatprep.mubr.f32.mxu0 0.0
  %389 = vmatmul.mubr.f32.gmra.mxu0 %v295
  %v390 = vpop.f32.mrf.mxu0
  %v391 = vadd.f32 %v267, %v390
  %v392 = vpop.f32.mrf.mxu0
  %393 = vmatprep.mubr.f32.mxu0 0.0
  %394 = vmatmul.mubr.f32.gmra.mxu0 %v298
  %v395 = vpop.f32.mrf.mxu0
  %v396 = vadd.f32 %v269, %v395
  %v397 = vpop.f32.mrf.mxu0
  %398 = vmatprep.mubr.f32.mxu0 0.0
  %399 = vmatmul.mubr.f32.gmra.mxu0 %v301
  %v400 = vpop.f32.mrf.mxu0
  %v401 = vadd.f32 %v271, %v400
  %v402 = vpop.f32.mrf.mxu0
  %403 = vmatprep.mubr.f32.mxu0 0.0
  %404 = vmatmul.mubr.f32.gmra.mxu0 %v304
  %v405 = vpop.f32.mrf.mxu0
  %v406 = vadd.f32 %v273, %v405
  %v407 = vpop.f32.mrf.mxu0
  %408 = vmatprep.mubr.f32.mxu0 0.0
  %409 = vmatmul.mubr.f32.gmra.mxu0 %v307
  %v410 = vpop.f32.mrf.mxu0
  %v411 = vadd.f32 %v275, %v410
  %v412 = vpop.f32.mrf.mxu0
  %413 = vdwg.mxu0
  %422 = vrot.lane.b32.xlu0 %v198, 96
  %v423 = vpop.permute.xlu0 %422
  %424 = vrot.lane.b32.xlu0 %v203, 96
  %v425 = vpop.permute.xlu0 %424
  %426 = vrot.lane.b32.xlu0 %v208, 96
  %v427 = vpop.permute.xlu0 %426
  %428 = vrot.lane.b32.xlu0 %v213, 96
  %v429 = vpop.permute.xlu0 %428
  %430 = vrot.lane.b32.xlu0 %v218, 96
  %v431 = vpop.permute.xlu0 %430
  %432 = vrot.lane.b32.xlu0 %v223, 96
  %v433 = vpop.permute.xlu0 %432
  %434 = vrot.lane.b32.xlu0 %v228, 96
  %v435 = vpop.permute.xlu0 %434
  %436 = vrot.lane.b32.xlu0 %v233, 96
  %v437 = vpop.permute.xlu0 %436
  %v447 = vsel %vm284, %v244, 0
  %v450 = vsel %vm284, %v245, 0
  %v453 = vsel %vm284, %v246, 0
  %v456 = vsel %vm284, %v247, 0
  %v459 = vsel %vm284, %v248, 0
  %v462 = vsel %vm284, %v249, 0
  %v465 = vsel %vm284, %v250, 0
  %v468 = vsel %vm284, %v251, 0
  %470 = vmatprep.subr.mxu0 0.0
  %471 = vmatpush1.msra.mxu0 0.0
  %472 = vmatprep.subr.mxu0 0.0
  %473 = vmatpush1.msra.mxu0 0.0
  %474 = vmatprep.subr.mxu0 0.0
  %475 = vmatpush1.msra.mxu0 0.0
  %476 = vmatprep.subr.mxu0 0.0
  %477 = vmatpush1.msra.mxu0 0.0
  %478 = vmatprep.subr.mxu0 0.0
  %479 = vmatpush1.msra.mxu0 0.0
  %480 = vmatprep.subr.mxu0 0.0
  %481 = vmatpush1.msra.mxu0 0.0
  %482 = vmatprep.subr.mxu0 0.0
  %483 = vmatpush1.msra.mxu0 0.0
  %484 = vmatprep.subr.mxu0 0.0
  %485 = vmatpush1.msra.mxu0 0.0
  %486 = vmatprep.subr.mxu0 0.0
  %487 = vmatpush1.msra.mxu0 %v233
  %488 = vmatprep.subr.mxu0 0.0
  %489 = vmatpush1.msra.mxu0 %v228
  %490 = vmatprep.subr.mxu0 0.0
  %491 = vmatpush1.msra.mxu0 %v223
  %492 = vmatprep.subr.mxu0 0.0
  %493 = vmatpush1.msra.mxu0 %v218
  %494 = vmatprep.subr.mxu0 0.0
  %495 = vmatpush1.msra.mxu0 %v213
  %496 = vmatprep.subr.mxu0 0.0
  %497 = vmatpush1.msra.mxu0 %v208
  %498 = vmatprep.subr.mxu0 0.0
  %499 = vmatpush1.msra.mxu0 %v203
  %500 = vmatprep.subr.mxu0 0.0
  %501 = vmatpush1.msra.mxu0 %v198
  %502 = vmatprep.subr.mxu0 0.0
  %503 = vmatpush2.msra.mxu0 0.0
  %504 = vmatprep.subr.mxu0 0.0
  %505 = vmatpush2.msra.mxu0 0.0
  %506 = vmatprep.subr.mxu0 0.0
  %507 = vmatpush2.msra.mxu0 0.0
  %508 = vmatprep.subr.mxu0 0.0
  %509 = vmatpush2.msra.mxu0 0.0
  %510 = vmatprep.subr.mxu0 0.0
  %511 = vmatpush2.msra.mxu0 0.0
  %512 = vmatprep.subr.mxu0 0.0
  %513 = vmatpush2.msra.mxu0 0.0
  %514 = vmatprep.subr.mxu0 0.0
  %515 = vmatpush2.msra.mxu0 0.0
  %516 = vmatprep.subr.mxu0 0.0
  %517 = vmatpush2.msra.mxu0 0.0
  %518 = vmatprep.subr.mxu0 0.0
  %519 = vmatpush2.msra.mxu0 0.0
  %520 = vmatprep.subr.mxu0 0.0
  %521 = vmatpush2.msra.mxu0 0.0
  %522 = vmatprep.subr.mxu0 0.0
  %523 = vmatpush2.msra.mxu0 0.0
  %524 = vmatprep.subr.mxu0 0.0
  %525 = vmatpush2.msra.mxu0 0.0
  %526 = vmatprep.subr.mxu0 0.0
  %527 = vmatpush2.msra.mxu0 0.0
  %528 = vmatprep.subr.mxu0 0.0
  %529 = vmatpush2.msra.mxu0 0.0
  %530 = vmatprep.subr.mxu0 0.0
  %531 = vmatpush2.msra.mxu0 0.0
  %532 = vmatprep.subr.mxu0 0.0
  %533 = vmatpush2.msra.mxu0 0.0
  %534 = vmatprep.mubr.f32.mxu0 0.0
  %535 = vmatmul.mubr.f32.gmra.mxu0 %v447
  %v536 = vpop.f32.mrf.mxu0
  %v537 = vadd.f32 %v423, %v536
  %v538 = vpop.f32.mrf.mxu0
  %539 = vmatprep.mubr.f32.mxu0 0.0
  %540 = vmatmul.mubr.f32.gmra.mxu0 %v450
  %v541 = vpop.f32.mrf.mxu0
  %v542 = vadd.f32 %v425, %v541
  %v543 = vpop.f32.mrf.mxu0
  %544 = vmatprep.mubr.f32.mxu0 0.0
  %545 = vmatmul.mubr.f32.gmra.mxu0 %v453
  %v546 = vpop.f32.mrf.mxu0
  %v547 = vadd.f32 %v427, %v546
  %v548 = vpop.f32.mrf.mxu0
  %549 = vmatprep.mubr.f32.mxu0 0.0
  %550 = vmatmul.mubr.f32.gmra.mxu0 %v456
  %v551 = vpop.f32.mrf.mxu0
  %v552 = vadd.f32 %v429, %v551
  %v553 = vpop.f32.mrf.mxu0
  %554 = vmatprep.mubr.f32.mxu0 0.0
  %555 = vmatmul.mubr.f32.gmra.mxu0 %v459
  %v556 = vpop.f32.mrf.mxu0
  %v557 = vadd.f32 %v431, %v556
  %v558 = vpop.f32.mrf.mxu0
  %559 = vmatprep.mubr.f32.mxu0 0.0
  %560 = vmatmul.mubr.f32.gmra.mxu0 %v462
  %v561 = vpop.f32.mrf.mxu0
  %v562 = vadd.f32 %v433, %v561
  %v563 = vpop.f32.mrf.mxu0
  %564 = vmatprep.mubr.f32.mxu0 0.0
  %565 = vmatmul.mubr.f32.gmra.mxu0 %v465
  %v566 = vpop.f32.mrf.mxu0
  %v567 = vadd.f32 %v435, %v566
  %v568 = vpop.f32.mrf.mxu0
  %569 = vmatprep.mubr.f32.mxu0 0.0
  %570 = vmatmul.mubr.f32.gmra.mxu0 %v468
  %v571 = vpop.f32.mrf.mxu0
  %v572 = vadd.f32 %v437, %v571
  %v573 = vpop.f32.mrf.mxu0
  %574 = vdwg.mxu0
  %v575 = vmax.f32 %v376, 0.0
  %v576 = vmax.f32 %v381, 0.0
  %v577 = vmax.f32 %v386, 0.0
  %v578 = vmax.f32 %v391, 0.0
  %v579 = vmax.f32 %v396, 0.0
  %v580 = vmax.f32 %v401, 0.0
  %v581 = vmax.f32 %v406, 0.0
  %v582 = vmax.f32 %v411, 0.0
  %v583 = vmax.f32 %v537, 0.0
  %v584 = vmax.f32 %v542, 0.0
  %v585 = vmax.f32 %v547, 0.0
  %v586 = vmax.f32 %v552, 0.0
  %v587 = vmax.f32 %v557, 0.0
  %v588 = vmax.f32 %v562, 0.0
  %v589 = vmax.f32 %v567, 0.0
  %v590 = vmax.f32 %v572, 0.0
  %vm591 = vcmask 261120
  %592 = vst.msk [vmem:[%s4] sm:$0xff] %vm591, %v575
  %593 = vst.msk [vmem:[%s4 + $0x8] sm:$0xff] %vm591, %v576
  %594 = vst.msk [vmem:[%s4 + $0x10] sm:$0xff] %vm591, %v577
  %595 = vst.msk [vmem:[%s4 + $0x18] sm:$0xff] %vm591, %v578
  %596 = vst.msk [vmem:[%s4 + $0x20] sm:$0xff] %vm591, %v579
  %597 = vst.msk [vmem:[%s4 + $0x28] sm:$0xff] %vm591, %v580
  %598 = vst.msk [vmem:[%s4 + $0x30] sm:$0xff] %vm591, %v581
  %599 = vst.msk [vmem:[%s4 + $0x38] sm:$0xff] %vm591, %v582
  %600 = vst.msk [vmem:[%s4 + $0x40] sm:$0xff] %vm591, %v583
  %601 = vst.msk [vmem:[%s4 + $0x48] sm:$0xff] %vm591, %v584
  %602 = vst.msk [vmem:[%s4 + $0x50] sm:$0xff] %vm591, %v585
  %603 = vst.msk [vmem:[%s4 + $0x58] sm:$0xff] %vm591, %v586
  %604 = vst.msk [vmem:[%s4 + $0x60] sm:$0xff] %vm591, %v587
  %605 = vst.msk [vmem:[%s4 + $0x68] sm:$0xff] %vm591, %v588
  %606 = vst.msk [vmem:[%s4 + $0x70] sm:$0xff] %vm591, %v589
  %607 = vst.msk [vmem:[%s4 + $0x78] sm:$0xff] %vm591, %v590
  // Predicated region
  $region18: #{tpu_custom_call.1} parent=0 // pred_check
    _
  $region19: #{tpu_custom_call.1} parent=0 // pred_check_branch
    %609 = sbr.rel (0) target = $region21
  $region20: #{tpu_custom_call.1} parent=0 // pred_region
    _
  $region21: #{tpu_custom_call.1} parent=0 // pred_fallthru
    _
  // Predicated region
  $region22: #{tpu_custom_call.1} parent=0 // pred_check
    _
  $region23: #{tpu_custom_call.1} parent=0 // pred_check_branch
    %611 = sbr.rel (0) target = $region25
  $region24: #{tpu_custom_call.1} parent=0 // pred_region
    _
  $region25: #{tpu_custom_call.1} parent=0 // pred_fallthru
    _

</llo_original>
